<compile_context>
chip_gen: v7x
topology: tpu7x:2x2x1
jax: 0.10.0
libtpu: 0.0.40
codegen_flags: <defaults>
</compile_context>

<pallas_src>
import jax
import jax.numpy as jnp
from jax.experimental import pallas as pl
from jax.experimental.pallas import tpu as pltpu

_LANES = 128
_MIN_PALLAS_ELEMENTS = 32 * 1024   # below this a standalone pallas_call is pure overhead
_MIN_GRID_STEPS = 4                # keep pipelining + megacore sharding alive

# Per-generation block-size / VMEM-limit / input-buffer-depth configuration.
_GEN_CONFIG = {
    "v5e": dict(block_bytes=3 << 20, vmem_limit=24 << 20, in_buffers=2),
    "v6e": dict(block_bytes=8 << 20, vmem_limit=48 << 20, in_buffers=2),
    "v7x": dict(block_bytes=4 << 20, vmem_limit=40 << 20, in_buffers=3),
}
_DEFAULT_CONFIG = dict(block_bytes=2 << 20, vmem_limit=None, in_buffers=2)


def _relu_kernel(x_ref, o_ref):
    # Elementwise ReLU on the current VMEM tile (pure VPU work).
    o_ref[...] = jnp.maximum(x_ref[...], 0)


def _tpu_generation():
    try:
        kind = jax.devices()[0].device_kind.lower()
    except Exception:
        return None
    if "v7" in kind:
        return "v7x"
    if "v6" in kind:
        return "v6e"
    if "v5" in kind and ("lite" in kind or "v5e" in kind):
        return "v5e"
    return None


def _sublane_multiple(dtype):
    # f32 -> 8 rows, bf16 -> 16, int8/fp8 -> 32 (sublane packing of the vreg).
    return max(8, 32 // jnp.dtype(dtype).itemsize)


def _pick_width(n):
    # Largest lane-dense width that divides n exactly (zero padding needed).
    for c in (4096, 2048, 1024, 512, 256, 128):
        if n % c == 0:
            return c
    return None


def _relu_slab(x2d, cfg, *, donate_input=False):
    """ReLU over a lane-dense (rows, width) slab via a tiled 1-D grid."""
    rows, width = x2d.shape
    dtype = x2d.dtype
    itemsize = jnp.dtype(dtype).itemsize
    sub = _sublane_multiple(dtype)
    row_bytes = width * itemsize

    # Byte-target tile, then clamp so we keep >= _MIN_GRID_STEPS grid steps
    # (pipelining + megacore) whenever rows allow it.
    tile_rows = max(sub, cfg["block_bytes"] // row_bytes)
    steps_cap = pl.cdiv(rows, _MIN_GRID_STEPS)
    steps_cap = max(sub, pl.cdiv(steps_cap, sub) * sub)   # round up to sublane mult
    tile_rows = min(tile_rows, steps_cap, rows)
    if tile_rows < rows:
        tile_rows = max(sub, (tile_rows // sub) * sub)    # (8,128)-aligned block

    grid = (pl.cdiv(rows, tile_rows),)   # partial last block is write-masked

    in_spec_kwargs = {}
    if cfg["in_buffers"] != 2:
        in_spec_kwargs["pipeline_mode"] = pl.Buffered(cfg["in_buffers"])
    in_spec = pl.BlockSpec((tile_rows, width), lambda i: (i, 0), **in_spec_kwargs)
    out_spec = pl.BlockSpec((tile_rows, width), lambda i: (i, 0))

    compiler_kwargs = dict(dimension_semantics=("parallel",))
    if cfg["vmem_limit"] is not None:
        compiler_kwargs["vmem_limit_bytes"] = cfg["vmem_limit"]

    n_elems = rows * width
    cost = pl.CostEstimate(flops=n_elems, transcendentals=0,
                           bytes_accessed=2 * n_elems * itemsize)

    return pl.pallas_call(
        _relu_kernel,
        out_shape=jax.ShapeDtypeStruct((rows, width), dtype),
        grid=grid,
        in_specs=[in_spec],
        out_specs=out_spec,
        # Only alias when the caller genuinely donates the input buffer;
        # otherwise XLA inserts a defensive full copy (worse than no alias).
        input_output_aliases=({0: 0} if donate_input else {}),
        compiler_params=pltpu.CompilerParams(**compiler_kwargs),
        cost_estimate=cost,
    )(x2d)


def relu_pallas(x, *, min_pallas_elements=_MIN_PALLAS_ELEMENTS, donate_input=False):
    """Elementwise ReLU. Any shape/dtype; returns same shape/dtype.

    NOTE: when this op is embedded in a larger jit graph, prefer the plain
    jnp.maximum path (raise min_pallas_elements) so XLA fuses the ReLU into
    its producer/consumer and the HBM round trip disappears entirely.
    """
    orig_shape = x.shape
    n = x.size
    if n == 0 or n < min_pallas_elements:
        # Small-input fast path: skip the kernel entirely.
        return jnp.maximum(x, 0)

    cfg = _GEN_CONFIG.get(_tpu_generation(), _DEFAULT_CONFIG)
    flat = x.reshape(-1)   # free for a contiguous buffer

    width = _pick_width(n)
    if width is not None:
        # Aligned case: zero padding, zero extra copies.
        out2d = _relu_slab(flat.reshape(n // width, width), cfg,
                           donate_input=donate_input)
        return out2d.reshape(orig_shape)

    # Ragged case: kernel on the largest 128-divisible prefix; the <128-element
    # tail is pure VPU work in plain jnp (no full-array pad + slice round trip).
    n_main = (n // _LANES) * _LANES
    if n_main == 0:
        return jnp.maximum(x, 0)
    main = flat[:n_main]
    tail = flat[n_main:]
    width = _pick_width(n_main) or _LANES
    out_main = _relu_slab(main.reshape(n_main // width, width), cfg,
                          donate_input=False)
    out_flat = jnp.concatenate([out_main.reshape(-1), jnp.maximum(tail, 0)])
    return out_flat.reshape(orig_shape)


if __name__ == "__main__":
    key = jax.random.PRNGKey(0)
    k0, k1, k2 = jax.random.split(key, 3)

    # 1) Literal PyTorch case: tiny input reshaped to (-1, 1, 2, 2) -> fast path.
    x_tiny = jax.random.normal(k0, (32,), dtype=jnp.float32).reshape(-1, 1, 2, 2)
    out_tiny = relu_pallas(x_tiny)

    # 2) Larger input exercising the tiled Pallas kernel (lane-dense, multi-step grid).
    x_big = jax.random.normal(k1, (1 << 18,), dtype=jnp.float32).reshape(-1, 1, 2, 2)
    out_big = relu_pallas(x_big)

    # 3) Ragged size (not a multiple of 128): prefix kernel + tiny jnp tail.
    x_ragged = jax.random.normal(k2, (33000,), dtype=jnp.float32).reshape(-1, 1, 2, 2)
    out_ragged = relu_pallas(x_ragged, min_pallas_elements=1)

    jax.block_until_ready((out_tiny, out_big, out_ragged))

    for xin, out in ((x_tiny, out_tiny), (x_big, out_big), (x_ragged, out_ragged)):
        ref = jnp.maximum(xin, 0.0)
        assert out.shape == xin.shape and out.dtype == xin.dtype
        assert jnp.array_equal(out, ref), "mismatch vs reference"

    print("KERNEL_OK")
</pallas_src>

<mosaic_0001>
module attributes {stable_mosaic.version = 11 : i64} {
  func.func @_relu_kernel(%arg0: i32, %arg1: memref<16x4096xf32, #tpu.memory_space<vmem>>, %arg2: memref<16x4096xf32, #tpu.memory_space<vmem>>) attributes {dimension_semantics = [#tpu.dimension_semantics<parallel>], iteration_bounds = array<i64: 4>, scalar_prefetch = 0 : i64, scratch_operands = 0 : i64, tpu.core_type = #tpu.core_type<tc>, window_params = [{transform_indices = @transform_0, window_bounds = array<i64: 16, 4096>}, {transform_indices = @transform_1, window_bounds = array<i64: 16, 4096>}]} {
    %c0 = arith.constant 0 : index
    %c0_0 = arith.constant 0 : index
    %0 = vector.load %arg1[%c0, %c0_0] : memref<16x4096xf32, #tpu.memory_space<vmem>>, vector<16x4096xf32>
    %cst = arith.constant 0.000000e+00 : f32
    %1 = vector.broadcast %cst : f32 to vector<16x4096xf32>
    %2 = arith.maximumf %0, %1 : vector<16x4096xf32>
    %c0_1 = arith.constant 0 : index
    %c0_2 = arith.constant 0 : index
    %3 = vector.load %arg2[%c0_1, %c0_2] : memref<16x4096xf32, #tpu.memory_space<vmem>>, vector<16x4096xf32>
    tpu.vector_store %arg2[%c0_1, %c0_2], %2 {strides = array<i32>} : memref<16x4096xf32, #tpu.memory_space<vmem>>, vector<16x4096xf32>,
    return
  }
  func.func @transform_0(%arg0: i32) -> (i32, i32) {
    %c0_i32 = arith.constant 0 : i32
    %c0_i32_0 = arith.constant 0 : i32
    return %arg0, %c0_i32 : i32, i32
  }
  func.func @transform_1(%arg0: i32) -> (i32, i32) {
    %c0_i32 = arith.constant 0 : i32
    %c0_i32_0 = arith.constant 0 : i32
    return %arg0, %c0_i32 : i32, i32
  }
}

</mosaic_0001>

<llo_original>
// kernel: tpu_custom_call.1
$region0: #{tpu_custom_call.1}
  #allocation0 [shape = 'u32[]', space=smem, size = 0x4, offset = 0x4, fixed_abs, tag = 'smem constant byte address 0x4 - core index']
  #allocation1 [shape = 'u32[144,128]{1,0:T(1,128)}', space=vmem, size = 0x12000, scoped, tag = 'internal scratch']
  %s0 = inlined_call_operand.hbm [shape: f32[64,4096], index: 0, kind: input, shape index: {}]
  %s1 = inlined_call_operand.hbm [shape: f32[64,4096], index: 1, kind: output, shape index: {}]
  %s2 = sld [smem:[#allocation0]]
  $region41: #{tpu_custom_call.1} parent=0
    _
  %s4 = ssub.s32 1, %s2
  %s5 = scalar_select 0, %s4, %s2
  $region1: #{tpu_custom_call.1} parent=0
    #allocation2 [shape = 'u8[524288]{0}', space=vmem, size = 0x80000, scoped, tag = 'input window, operand 0']
    #allocation3 [shape = 's32[2]{0}', space=sflag, size = 0x8, scoped, tag = 'scoped memory for tpu_custom_call.1']
    #allocation4 [shape = 's32[2]{0}', space=sflag, size = 0x8, scoped, tag = 'scoped memory for tpu_custom_call.1']
    #allocation5 [shape = 'u8[524288]{0}', space=vmem, size = 0x80000, scoped, tag = 'output window, operand 0']
    %6 = vsyncpa [#allocation3], 0
    %s7 = scalar_lea.sflag [#allocation3], 1
    %8 = vsyncpa %s7, 0
    %9 = vsyncpa [#allocation4], 0
    %s10 = scalar_lea.sflag [#allocation4], 1
    %11 = vsyncpa %s10, 0
    loop: start=0, step=1, limit=6
    $region2: #{tpu_custom_call.1} parent=1 // loop_pre_header
      _
    $region3: #{tpu_custom_call.1} parent=1 // loop_header
      %s13 = sphi 0, %s17
      %p14 = scmp.ge.s32.totalorder %s13, 6
      %s23 = sphi 0, %s25
      %s26 = sphi 0, %s23
      %s27 = sphi 0, %s26
      %s43 = sphi 0, %s27
      %s49 = sphi 0, %s51
      %s52 = sphi 0, %s49
      %s53 = sphi 0, %s52
      %s69 = sphi 0, %s53
    $region4: #{tpu_custom_call.1} parent=1 // loop_header_branch
      %16 = sbr.rel (%p14) target = $region8
    $region5: #{tpu_custom_call.1} parent=1 // loop_body
      %s18 = ssub.s32 %s13, 1
      %s19 = ssub.s32 %s13, 2
      %s20 = sadd.s32 %s13, 1
      %s21 = ssub.s32 %s13, %s20
      %p22 = scmp.eq.s32.totalorder %s21, 0
      %s24 = sadd.s32 %s23, 1
      %s25 = scalar_select %p22, %s23, %s24
      %p28 = pneg %p22
      %p29 = scmp.eq.s32.totalorder %s13, 3
      %p30 = por %p28, %p29
      %p31 = scmp.ne.s32.totalorder %s23, %s26
      %p32 = scmp.eq.s32.totalorder %s13, 0
      %p33 = por %p31, %p32
      %p34 = scmp.ne.s32.totalorder %s23, %s26
      %p35 = scmp.eq.s32.totalorder %s18, 3
      %p36 = por %p34, %p35
      %p37 = scmp.ne.s32.totalorder %s26, %s27
      %p38 = scmp.eq.s32.totalorder %s18, 0
      %p39 = por %p37, %p38
      %p40 = scmp.ne.s32.totalorder %s26, %s27
      %p41 = scmp.eq.s32.totalorder %s19, 3
      %p42 = por %p40, %p41
      %p44 = scmp.ne.s32.totalorder %s27, %s43
      %p45 = scmp.eq.s32.totalorder %s19, 0
      %p46 = por %p44, %p45
      %s47 = ssub.s32 %s13, %s20
      %p48 = scmp.eq.s32.totalorder %s47, 0
      %s50 = sadd.s32 %s49, 1
      %s51 = scalar_select %p48, %s49, %s50
      %p54 = pneg %p48
      %p55 = scmp.eq.s32.totalorder %s13, 3
      %p56 = por %p54, %p55
      %p57 = scmp.ne.s32.totalorder %s49, %s52
      %p58 = scmp.eq.s32.totalorder %s13, 0
      %p59 = por %p57, %p58
      %p60 = scmp.ne.s32.totalorder %s49, %s52
      %p61 = scmp.eq.s32.totalorder %s18, 3
      %p62 = por %p60, %p61
      %p63 = scmp.ne.s32.totalorder %s52, %s53
      %p64 = scmp.eq.s32.totalorder %s18, 0
      %p65 = por %p63, %p64
      %p66 = scmp.ne.s32.totalorder %s52, %s53
      %p67 = scmp.eq.s32.totalorder %s19, 3
      %p68 = por %p66, %p67
      %p70 = scmp.ne.s32.totalorder %s53, %s69
      %p71 = scmp.eq.s32.totalorder %s19, 0
      %p72 = por %p70, %p71
      %p73 = scmp.le.s32.totalorder 1, %s13
      %p74 = scmp.lt.s32.totalorder %s13, 5
      %p75 = pnand %p73, %p74
      %p76 = pneg %p75
      // Predicated region
      $region9: #{tpu_custom_call.1} parent=5 // pred_check
        _
      $region10: #{tpu_custom_call.1} parent=5 // pred_check_branch
        %78 = sbr.rel (%p75) target = $region12
      $region11: #{tpu_custom_call.1} parent=5 // pred_region
        %s79 = ssub.s32 %s13, 1
      $region12: #{tpu_custom_call.1} parent=5 // pred_fallthru
        _
      %p80 = scmp.lt.s32.totalorder %s13, 4
      // Predicated region
      $region13: #{tpu_custom_call.1} parent=5 // pred_check
        %p81 = pneg %p80
      $region14: #{tpu_custom_call.1} parent=5 // pred_check_branch
        %83 = sbr.rel (%p81) target = $region16
      $region15: #{tpu_custom_call.1} parent=5 // pred_region
        // Predicated region
        $region17: #{tpu_custom_call.1} parent=15 // pred_check
          %p84 = pneg %p33
        $region18: #{tpu_custom_call.1} parent=15 // pred_check_branch
          %86 = sbr.rel (%p84) target = $region20
        $region19: #{tpu_custom_call.1} parent=15 // pred_region
          %s87 = sand.u32 %s23, 1
          %s88 = scalar_lea.sflag [#allocation3], %s87
          %s89 = sand.u32 %s23, 1
          %s90 = smul.addr %s89, 512
          %s91 = scalar_lea.vmem [#allocation2], %s90
          %s92 = smul.u32 2, %s13
          %s94 = ssub.s32 8192, 8192
          %95 = vsyncadd %s88, %s94
          %s96 = smul.addr %s92, 32
          %s97 = smul.addr %s96, 128
          %s98 = scalar_lea.hbm %s0, %s97
          %s99 = sshll.u32 %s91, 4
          %s100 = int_to_ptr.vmem [resolvable:$true] %s99
          %105 = dma.hbm_to_vmem [thread:$0]  %s98, 8192, %s100, %s88, 4096, 4096, 256
        $region20: #{tpu_custom_call.1} parent=15 // pred_fallthru
          _
      $region16: #{tpu_custom_call.1} parent=5 // pred_fallthru
        _
      %p106 = scmp.le.s32.totalorder 1, %s13
      %p107 = scmp.lt.s32.totalorder %s13, 5
      %p108 = pnand %p106, %p107
      %p109 = pneg %p108
      // Predicated region
      $region21: #{tpu_custom_call.1} parent=5 // pred_check
        _
      $region22: #{tpu_custom_call.1} parent=5 // pred_check_branch
        %111 = sbr.rel (%p108) target = $region24
      $region23: #{tpu_custom_call.1} parent=5 // pred_region
        %s112 = ssub.s32 %s13, 1
        %s113 = sand.u32 %s26, 1
        %s114 = scalar_lea.sflag [#allocation3], %s113
        %s115 = sand.u32 %s26, 1
        %s116 = smul.addr %s115, 512
        %s117 = scalar_lea.vmem [#allocation2], %s116
        // Predicated region
        $region25: #{tpu_custom_call.1} parent=23 // pred_check
          %p118 = pneg %p39
        $region26: #{tpu_custom_call.1} parent=23 // pred_check_branch
          %120 = sbr.rel (%p118) target = $region28
        $region27: #{tpu_custom_call.1} parent=23 // pred_region
          %121 = dma.done %s114, 8192
        $region28: #{tpu_custom_call.1} parent=23 // pred_fallthru
          _
        %s122 = sand.u32 %s26, 1
        %s123 = scalar_lea.sflag [#allocation3], %s122
        %s124 = sand.u32 %s26, 1
        %s125 = smul.addr %s124, 512
        %s126 = scalar_lea.vmem [#allocation2], %s125
        %p127 = pneg %p39
        %p128 = pneg %p36
        %p129 = pneg %p65
        %p130 = pneg %p62
        %s131 = sand.u32 %s52, 1
        %s132 = scalar_lea.sflag [#allocation4], %s131
        %s133 = sand.u32 %s52, 1
        %s134 = smul.addr %s133, 512
        %s135 = scalar_lea.vmem [#allocation5], %s134
        %s136 = smul.u32 2, %s18
        %s137 = smul.u32 2, %s18
        %v138 = vld [vmem:[%s117] sm:$0xff]
        %v139 = vld [vmem:[%s117 + $0x8] sm:$0xff]
        %v140 = vld [vmem:[%s117 + $0x10] sm:$0xff]
        %v141 = vld [vmem:[%s117 + $0x18] sm:$0xff]
        %v142 = vld [vmem:[%s117 + $0x20] sm:$0xff]
        %v143 = vld [vmem:[%s117 + $0x28] sm:$0xff]
        %v144 = vld [vmem:[%s117 + $0x30] sm:$0xff]
        %v145 = vld [vmem:[%s117 + $0x38] sm:$0xff]
        %v146 = vld [vmem:[%s117 + $0x40] sm:$0xff]
        %v147 = vld [vmem:[%s117 + $0x48] sm:$0xff]
        %v148 = vld [vmem:[%s117 + $0x50] sm:$0xff]
        %v149 = vld [vmem:[%s117 + $0x58] sm:$0xff]
        %v150 = vld [vmem:[%s117 + $0x60] sm:$0xff]
        %v151 = vld [vmem:[%s117 + $0x68] sm:$0xff]
        %v152 = vld [vmem:[%s117 + $0x70] sm:$0xff]
        %v153 = vld [vmem:[%s117 + $0x78] sm:$0xff]
        %v154 = vld [vmem:[%s117 + $0x80] sm:$0xff]
        %v155 = vld [vmem:[%s117 + $0x88] sm:$0xff]
        %v156 = vld [vmem:[%s117 + $0x90] sm:$0xff]
        %v157 = vld [vmem:[%s117 + $0x98] sm:$0xff]
        %v158 = vld [vmem:[%s117 + $0xa0] sm:$0xff]
        %v159 = vld [vmem:[%s117 + $0xa8] sm:$0xff]
        %v160 = vld [vmem:[%s117 + $0xb0] sm:$0xff]
        %v161 = vld [vmem:[%s117 + $0xb8] sm:$0xff]
        %v162 = vld [vmem:[%s117 + $0xc0] sm:$0xff]
        %v163 = vld [vmem:[%s117 + $0xc8] sm:$0xff]
        %v164 = vld [vmem:[%s117 + $0xd0] sm:$0xff]
        %v165 = vld [vmem:[%s117 + $0xd8] sm:$0xff]
        %v166 = vld [vmem:[%s117 + $0xe0] sm:$0xff]
        %v167 = vld [vmem:[%s117 + $0xe8] sm:$0xff]
        %v168 = vld [vmem:[%s117 + $0xf0] sm:$0xff]
        %v169 = vld [vmem:[%s117 + $0xf8] sm:$0xff]
        %v170 = vld [vmem:[%s117 + $0x100] sm:$0xff]
        %v171 = vld [vmem:[%s117 + $0x108] sm:$0xff]
        %v172 = vld [vmem:[%s117 + $0x110] sm:$0xff]
        %v173 = vld [vmem:[%s117 + $0x118] sm:$0xff]
        %v174 = vld [vmem:[%s117 + $0x120] sm:$0xff]
        %v175 = vld [vmem:[%s117 + $0x128] sm:$0xff]
        %v176 = vld [vmem:[%s117 + $0x130] sm:$0xff]
        %v177 = vld [vmem:[%s117 + $0x138] sm:$0xff]
        %v178 = vld [vmem:[%s117 + $0x140] sm:$0xff]
        %v179 = vld [vmem:[%s117 + $0x148] sm:$0xff]
        %v180 = vld [vmem:[%s117 + $0x150] sm:$0xff]
        %v181 = vld [vmem:[%s117 + $0x158] sm:$0xff]
        %v182 = vld [vmem:[%s117 + $0x160] sm:$0xff]
        %v183 = vld [vmem:[%s117 + $0x168] sm:$0xff]
        %v184 = vld [vmem:[%s117 + $0x170] sm:$0xff]
        %v185 = vld [vmem:[%s117 + $0x178] sm:$0xff]
        %v186 = vld [vmem:[%s117 + $0x180] sm:$0xff]
        %v187 = vld [vmem:[%s117 + $0x188] sm:$0xff]
        %v188 = vld [vmem:[%s117 + $0x190] sm:$0xff]
        %v189 = vld [vmem:[%s117 + $0x198] sm:$0xff]
        %v190 = vld [vmem:[%s117 + $0x1a0] sm:$0xff]
        %v191 = vld [vmem:[%s117 + $0x1a8] sm:$0xff]
        %v192 = vld [vmem:[%s117 + $0x1b0] sm:$0xff]
        %v193 = vld [vmem:[%s117 + $0x1b8] sm:$0xff]
        %v194 = vld [vmem:[%s117 + $0x1c0] sm:$0xff]
        %v195 = vld [vmem:[%s117 + $0x1c8] sm:$0xff]
        %v196 = vld [vmem:[%s117 + $0x1d0] sm:$0xff]
        %v197 = vld [vmem:[%s117 + $0x1d8] sm:$0xff]
        %v198 = vld [vmem:[%s117 + $0x1e0] sm:$0xff]
        %v199 = vld [vmem:[%s117 + $0x1e8] sm:$0xff]
        %v200 = vld [vmem:[%s117 + $0x1f0] sm:$0xff]
        %v201 = vld [vmem:[%s117 + $0x1f8] sm:$0xff]
        %v202 = vmax.f32 %v138, 0.0
        %v203 = vmax.f32 %v139, 0.0
        %v204 = vmax.f32 %v140, 0.0
        %v205 = vmax.f32 %v141, 0.0
        %v206 = vmax.f32 %v142, 0.0
        %v207 = vmax.f32 %v143, 0.0
        %v208 = vmax.f32 %v144, 0.0
        %v209 = vmax.f32 %v145, 0.0
        %v210 = vmax.f32 %v146, 0.0
        %v211 = vmax.f32 %v147, 0.0
        %v212 = vmax.f32 %v148, 0.0
        %v213 = vmax.f32 %v149, 0.0
        %v214 = vmax.f32 %v150, 0.0
        %v215 = vmax.f32 %v151, 0.0
        %v216 = vmax.f32 %v152, 0.0
        %v217 = vmax.f32 %v153, 0.0
        %v218 = vmax.f32 %v154, 0.0
        %v219 = vmax.f32 %v155, 0.0
        %v220 = vmax.f32 %v156, 0.0
        %v221 = vmax.f32 %v157, 0.0
        %v222 = vmax.f32 %v158, 0.0
        %v223 = vmax.f32 %v159, 0.0
        %v224 = vmax.f32 %v160, 0.0
        %v225 = vmax.f32 %v161, 0.0
        %v226 = vmax.f32 %v162, 0.0
        %v227 = vmax.f32 %v163, 0.0
        %v228 = vmax.f32 %v164, 0.0
        %v229 = vmax.f32 %v165, 0.0
        %v230 = vmax.f32 %v166, 0.0
        %v231 = vmax.f32 %v167, 0.0
        %v232 = vmax.f32 %v168, 0.0
        %v233 = vmax.f32 %v169, 0.0
        %v234 = vmax.f32 %v170, 0.0
        %v235 = vmax.f32 %v171, 0.0
        %v236 = vmax.f32 %v172, 0.0
        %v237 = vmax.f32 %v173, 0.0
        %v238 = vmax.f32 %v174, 0.0
        %v239 = vmax.f32 %v175, 0.0
        %v240 = vmax.f32 %v176, 0.0
        %v241 = vmax.f32 %v177, 0.0
        %v242 = vmax.f32 %v178, 0.0
        %v243 = vmax.f32 %v179, 0.0
        %v244 = vmax.f32 %v180, 0.0
        %v245 = vmax.f32 %v181, 0.0
        %v246 = vmax.f32 %v182, 0.0
        %v247 = vmax.f32 %v183, 0.0
        %v248 = vmax.f32 %v184, 0.0
        %v249 = vmax.f32 %v185, 0.0
        %v250 = vmax.f32 %v186, 0.0
        %v251 = vmax.f32 %v187, 0.0
        %v252 = vmax.f32 %v188, 0.0
        %v253 = vmax.f32 %v189, 0.0
        %v254 = vmax.f32 %v190, 0.0
        %v255 = vmax.f32 %v191, 0.0
        %v256 = vmax.f32 %v192, 0.0
        %v257 = vmax.f32 %v193, 0.0
        %v258 = vmax.f32 %v194, 0.0
        %v259 = vmax.f32 %v195, 0.0
        %v260 = vmax.f32 %v196, 0.0
        %v261 = vmax.f32 %v197, 0.0
        %v262 = vmax.f32 %v198, 0.0
        %v263 = vmax.f32 %v199, 0.0
        %v264 = vmax.f32 %v200, 0.0
        %v265 = vmax.f32 %v201, 0.0
        %266 = vst [vmem:[%s135] sm:$0xff] %v202
        %267 = vst [vmem:[%s135 + $0x8] sm:$0xff] %v203
        %268 = vst [vmem:[%s135 + $0x10] sm:$0xff] %v204
        %269 = vst [vmem:[%s135 + $0x18] sm:$0xff] %v205
        %270 = vst [vmem:[%s135 + $0x20] sm:$0xff] %v206
        %271 = vst [vmem:[%s135 + $0x28] sm:$0xff] %v207
        %272 = vst [vmem:[%s135 + $0x30] sm:$0xff] %v208
        %273 = vst [vmem:[%s135 + $0x38] sm:$0xff] %v209
        %274 = vst [vmem:[%s135 + $0x40] sm:$0xff] %v210
        %275 = vst [vmem:[%s135 + $0x48] sm:$0xff] %v211
        %276 = vst [vmem:[%s135 + $0x50] sm:$0xff] %v212
        %277 = vst [vmem:[%s135 + $0x58] sm:$0xff] %v213
        %278 = vst [vmem:[%s135 + $0x60] sm:$0xff] %v214
        %279 = vst [vmem:[%s135 + $0x68] sm:$0xff] %v215
        %280 = vst [vmem:[%s135 + $0x70] sm:$0xff] %v216
        %281 = vst [vmem:[%s135 + $0x78] sm:$0xff] %v217
        %282 = vst [vmem:[%s135 + $0x80] sm:$0xff] %v218
        %283 = vst [vmem:[%s135 + $0x88] sm:$0xff] %v219
        %284 = vst [vmem:[%s135 + $0x90] sm:$0xff] %v220
        %285 = vst [vmem:[%s135 + $0x98] sm:$0xff] %v221
        %286 = vst [vmem:[%s135 + $0xa0] sm:$0xff] %v222
        %287 = vst [vmem:[%s135 + $0xa8] sm:$0xff] %v223
        %288 = vst [vmem:[%s135 + $0xb0] sm:$0xff] %v224
        %289 = vst [vmem:[%s135 + $0xb8] sm:$0xff] %v225
        %290 = vst [vmem:[%s135 + $0xc0] sm:$0xff] %v226
        %291 = vst [vmem:[%s135 + $0xc8] sm:$0xff] %v227
        %292 = vst [vmem:[%s135 + $0xd0] sm:$0xff] %v228
        %293 = vst [vmem:[%s135 + $0xd8] sm:$0xff] %v229
        %294 = vst [vmem:[%s135 + $0xe0] sm:$0xff] %v230
        %295 = vst [vmem:[%s135 + $0xe8] sm:$0xff] %v231
        %296 = vst [vmem:[%s135 + $0xf0] sm:$0xff] %v232
        %297 = vst [vmem:[%s135 + $0xf8] sm:$0xff] %v233
        %298 = vst [vmem:[%s135 + $0x100] sm:$0xff] %v234
        %299 = vst [vmem:[%s135 + $0x108] sm:$0xff] %v235
        %300 = vst [vmem:[%s135 + $0x110] sm:$0xff] %v236
        %301 = vst [vmem:[%s135 + $0x118] sm:$0xff] %v237
        %302 = vst [vmem:[%s135 + $0x120] sm:$0xff] %v238
        %303 = vst [vmem:[%s135 + $0x128] sm:$0xff] %v239
        %304 = vst [vmem:[%s135 + $0x130] sm:$0xff] %v240
        %305 = vst [vmem:[%s135 + $0x138] sm:$0xff] %v241
        %306 = vst [vmem:[%s135 + $0x140] sm:$0xff] %v242
        %307 = vst [vmem:[%s135 + $0x148] sm:$0xff] %v243
        %308 = vst [vmem:[%s135 + $0x150] sm:$0xff] %v244
        %309 = vst [vmem:[%s135 + $0x158] sm:$0xff] %v245
        %310 = vst [vmem:[%s135 + $0x160] sm:$0xff] %v246
        %311 = vst [vmem:[%s135 + $0x168] sm:$0xff] %v247
        %312 = vst [vmem:[%s135 + $0x170] sm:$0xff] %v248
        %313 = vst [vmem:[%s135 + $0x178] sm:$0xff] %v249
        %314 = vst [vmem:[%s135 + $0x180] sm:$0xff] %v250
        %315 = vst [vmem:[%s135 + $0x188] sm:$0xff] %v251
        %316 = vst [vmem:[%s135 + $0x190] sm:$0xff] %v252
        %317 = vst [vmem:[%s135 + $0x198] sm:$0xff] %v253
        %318 = vst [vmem:[%s135 + $0x1a0] sm:$0xff] %v254
        %319 = vst [vmem:[%s135 + $0x1a8] sm:$0xff] %v255
        %320 = vst [vmem:[%s135 + $0x1b0] sm:$0xff] %v256
        %321 = vst [vmem:[%s135 + $0x1b8] sm:$0xff] %v257
        %322 = vst [vmem:[%s135 + $0x1c0] sm:$0xff] %v258
        %323 = vst [vmem:[%s135 + $0x1c8] sm:$0xff] %v259
        %324 = vst [vmem:[%s135 + $0x1d0] sm:$0xff] %v260
        %325 = vst [vmem:[%s135 + $0x1d8] sm:$0xff] %v261
        %326 = vst [vmem:[%s135 + $0x1e0] sm:$0xff] %v262
        %327 = vst [vmem:[%s135 + $0x1e8] sm:$0xff] %v263
        %328 = vst [vmem:[%s135 + $0x1f0] sm:$0xff] %v264
        %329 = vst [vmem:[%s135 + $0x1f8] sm:$0xff] %v265
        %s330 = sand.u32 %s52, 1
        %s331 = scalar_lea.sflag [#allocation4], %s330
        %s332 = sand.u32 %s52, 1
        %s333 = smul.addr %s332, 512
        %s334 = scalar_lea.vmem [#allocation5], %s333
        // Predicated region
        $region29: #{tpu_custom_call.1} parent=23 // pred_check
          %p335 = pneg %p62
        $region30: #{tpu_custom_call.1} parent=23 // pred_check_branch
          %337 = sbr.rel (%p335) target = $region32
        $region31: #{tpu_custom_call.1} parent=23 // pred_region
          %s338 = smul.u32 2, %s18
          %s340 = ssub.s32 8192, 8192
          %341 = vsyncadd %s331, %s340
          %s342 = smul.addr %s338, 32
          %s343 = smul.addr %s342, 128
          %s344 = scalar_lea.hbm %s1, %s343
          %s345 = sshll.u32 %s334, 4
          %s346 = int_to_ptr.vmem [resolvable:$true] %s345
          %351 = dma.vmem_to_hbm [thread:$0]  %s346, 8192, %s344, %s331, 4096, 4096, 256
        $region32: #{tpu_custom_call.1} parent=23 // pred_fallthru
          _
      $region24: #{tpu_custom_call.1} parent=5 // pred_fallthru
        _
      %p352 = scmp.le.s32.totalorder 2, %s13
      // Predicated region
      $region33: #{tpu_custom_call.1} parent=5 // pred_check
        %p353 = pneg %p352
      $region34: #{tpu_custom_call.1} parent=5 // pred_check_branch
        %355 = sbr.rel (%p353) target = $region36
      $region35: #{tpu_custom_call.1} parent=5 // pred_region
        %s356 = ssub.s32 %s13, 2
        // Predicated region
        $region37: #{tpu_custom_call.1} parent=35 // pred_check
          %p357 = pneg %p68
        $region38: #{tpu_custom_call.1} parent=35 // pred_check_branch
          %359 = sbr.rel (%p357) target = $region40
        $region39: #{tpu_custom_call.1} parent=35 // pred_region
          %s360 = sand.u32 %s53, 1
          %s361 = scalar_lea.sflag [#allocation4], %s360
          %s362 = sand.u32 %s53, 1
          %s363 = smul.addr %s362, 512
          %s364 = scalar_lea.vmem [#allocation5], %s363
          %365 = dma.done %s361, 8192
        $region40: #{tpu_custom_call.1} parent=35 // pred_fallthru
          _
      $region36: #{tpu_custom_call.1} parent=5 // pred_fallthru
        _
    $region6: #{tpu_custom_call.1} parent=1 // loop_footer
      %s17 = sadd.s32 1, %s13
    $region7: #{tpu_custom_call.1} parent=1 // loop_footer_branch
      %12 = sbr.rel target = $region3
    $region8: #{tpu_custom_call.1} parent=1 // loop_exit
      _
    %366 = vsyncpa [#allocation3], 1
    %s367 = scalar_lea.sflag [#allocation3], 1
    %368 = vsyncpa %s367, 1
    %369 = vsyncpa [#allocation4], 1
    %s370 = scalar_lea.sflag [#allocation4], 1
    %371 = vsyncpa %s370, 1

</llo_original>
